<compile_context>
chip_gen: v7x
topology: tpu7x:2x2x1
jax: 0.10.0
libtpu: 0.0.40
codegen_flags: <defaults>
</compile_context>

<pallas_src>
import functools

import jax
import jax.numpy as jnp
from jax.experimental import pallas as pl
from jax.experimental.pallas import tpu as pltpu

_LANE = 128        # vreg lane width: keep last dims of weights/output lane-dense
_SUBLANE = 8       # f32 sublane count: batch tile must be a multiple of 8
_NEG_MASK = -1e30  # bias for padded action columns -> exp underflows to 0


def _round_up(x, m):
    return (x + m - 1) // m * m


def _cdiv(a, b):
    return (a + b - 1) // b


def _num_tensorcores():
    """Best-effort TensorCore count of the local chip (v7x=2, v5e/v6e=1)."""
    try:
        info = pltpu.get_tpu_info()
    except Exception:
        return 1
    for attr in ("num_cores", "core_count", "num_tensorcores",
                 "tensorcores_per_chip", "num_tensor_cores"):
        v = getattr(info, attr, None)
        try:
            v = int(v)
        except (TypeError, ValueError):
            continue
        if v > 0:
            return v
    return 1


def _policy_net_kernel(x_ref, w1_ref, b1_ref, w2_ref, b2_ref, w3_ref, b3_ref, o_ref):
    # nH / nA are pre-padded to 128 lanes by prepare_policy_params(); padded
    # action columns carry a -1e30 bias so softmax assigns them probability 0.
    w_dtype = w1_ref.dtype

    # h = relu(x @ W1 + b1) — cast x to the weight dtype so bf16 weights use
    # the native bf16 MXU path (no-op for f32); accumulate in f32.
    x = x_ref[...].astype(w_dtype)
    h = jnp.dot(x, w1_ref[...], preferred_element_type=jnp.float32) + b1_ref[...]
    h = jnp.maximum(h, 0.0)

    # h2 = relu(h @ W2 + b2)
    h2 = jnp.dot(h.astype(w_dtype), w2_ref[...],
                 preferred_element_type=jnp.float32) + b2_ref[...]
    h2 = jnp.maximum(h2, 0.0)

    # logits = h2 @ W3 + b3 ; softmax over the last (action) axis == PyTorch dim=1
    logits = jnp.dot(h2.astype(w_dtype), w3_ref[...],
                     preferred_element_type=jnp.float32) + b3_ref[...]
    m = jnp.max(logits, axis=-1, keepdims=True)
    e = jnp.exp(logits - m)
    denom = jnp.sum(e, axis=-1, keepdims=True)
    # Exact normalization: rows must sum to 1 for downstream Categorical sampling.
    o_ref[...] = (e / denom).astype(o_ref.dtype)


def prepare_policy_params(params, weight_dtype=None):
    """Pad weights/biases ONCE to lane-dense shapes (call at init, reuse per step).

    params: W1 (nS,nH), b1 (1,nH), W2 (nH,nH), b2 (1,nH), W3 (nH,nA), b3 (1,nA),
    weights stored (in_features, out_features). nH/nA are zero-padded to
    multiples of 128; nS is left unpadded (MXU pads K internally). Padded
    action columns get a -1e30 bias so softmax gives them exactly 0.
    """
    f32 = jnp.float32
    W1, W2, W3 = params["W1"], params["W2"], params["W3"]
    nS, nH = W1.shape
    nA = W3.shape[1]
    nH_p = _round_up(nH, _LANE)
    nA_p = _round_up(nA, _LANE)
    wdt = jnp.dtype(weight_dtype) if weight_dtype is not None else W1.dtype

    return {
        "W1": jnp.zeros((nS, nH_p), wdt).at[:, :nH].set(W1.astype(wdt)),
        "b1": jnp.zeros((1, nH_p), f32).at[:, :nH].set(
            jnp.asarray(params["b1"], f32).reshape(1, nH)),
        "W2": jnp.zeros((nH_p, nH_p), wdt).at[:nH, :nH].set(W2.astype(wdt)),
        "b2": jnp.zeros((1, nH_p), f32).at[:, :nH].set(
            jnp.asarray(params["b2"], f32).reshape(1, nH)),
        "W3": jnp.zeros((nH_p, nA_p), wdt).at[:nH, :nA].set(W3.astype(wdt)),
        "b3": jnp.full((1, nA_p), _NEG_MASK, f32).at[:, :nA].set(
            jnp.asarray(params["b3"], f32).reshape(1, nA)),
        "nA": int(nA),
    }


@functools.partial(jax.jit, static_argnames=("nA", "n_steps"))
def _policy_forward_padded(x, W1, b1, W2, b2, W3, b3, *, nA, n_steps):
    B, nS = x.shape
    nH_p = W1.shape[1]
    nA_p = W3.shape[1]

    # Batch tiling: pad only to sublane alignment plus at most one sublane
    # residual per extra grid step — never a full tile of wasted work.
    n_steps = max(1, min(int(n_steps), _round_up(B, _SUBLANE) // _SUBLANE))
    tb = _round_up(_cdiv(_round_up(B, _SUBLANE), n_steps), _SUBLANE)
    B_p = tb * n_steps
    grid = (n_steps,)

    x_p = x if B_p == B else jnp.zeros((B_p, nS), x.dtype).at[:B].set(x)

    in_specs = [
        # x tile: batch-tiled, feature dim left at full (unpadded) extent —
        # last block dim == full array dim is legal on TPU.
        pl.BlockSpec((tb, nS), lambda i: (i, 0)),
        # Weights/biases: constant-index blocks broadcast to every grid step.
        # (If nH is ever scaled up, add pipeline_mode=pl.Buffered(1) here and
        #  set vmem_limit_bytes in CompilerParams; irrelevant at these sizes.)
        pl.BlockSpec((nS, nH_p), lambda i: (0, 0)),    # W1
        pl.BlockSpec((1, nH_p), lambda i: (0, 0)),     # b1
        pl.BlockSpec((nH_p, nH_p), lambda i: (0, 0)),  # W2
        pl.BlockSpec((1, nH_p), lambda i: (0, 0)),     # b2
        pl.BlockSpec((nH_p, nA_p), lambda i: (0, 0)),  # W3
        pl.BlockSpec((1, nA_p), lambda i: (0, 0)),     # b3
    ]
    out_specs = pl.BlockSpec((tb, nA_p), lambda i: (i, 0))

    wbytes = jnp.dtype(W1.dtype).itemsize
    cost = pl.CostEstimate(
        flops=2 * B_p * (nS * nH_p + nH_p * nH_p + nH_p * nA_p),
        transcendentals=B_p * nA_p,
        bytes_accessed=(
            B_p * nS * x.dtype.itemsize + B_p * nA_p * 4
            + (nS * nH_p + nH_p * nH_p + nH_p * nA_p) * wbytes
            + (2 * nH_p + nA_p) * 4
        ),
    )

    out_padded = pl.pallas_call(
        _policy_net_kernel,
        out_shape=jax.ShapeDtypeStruct((B_p, nA_p), jnp.float32),
        grid_spec=pltpu.PrefetchScalarGridSpec(
            num_scalar_prefetch=0,
            grid=grid,
            in_specs=in_specs,
            out_specs=out_specs,
        ),
        compiler_params=pltpu.CompilerParams(
            # Batch axis is embarrassingly parallel -> sharded across both
            # TensorCores on v7x when n_steps >= 2; harmless on v5e/v6e.
            dimension_semantics=("parallel",),
        ),
        cost_estimate=cost,
    )(x_p, W1, b1, W2, b2, W3, b3)

    return out_padded[:B, :nA]


def policy_net_forward(x, prepared_params, n_steps=None):
    """softmax(relu(relu(x@W1+b1)@W2+b2)@W3+b3, axis=1) using pre-padded params."""
    if n_steps is None:
        n_steps = _num_tensorcores()   # 1 step on v5e/v6e, 2 parallel steps on v7x
    p = prepared_params
    return _policy_forward_padded(
        x, p["W1"], p["b1"], p["W2"], p["b2"], p["W3"], p["b3"],
        nA=p["nA"], n_steps=int(n_steps))


def init_policy_net_params(key, nS, nH, nA, weight_dtype=jnp.float32):
    """Deterministic init mimicking PyTorch nn.Linear default:
    U(-1/sqrt(fan_in), 1/sqrt(fan_in)) for weight and bias.
    Weights stored as (in_features, out_features)."""
    k1, k2, k3, k4, k5, k6 = jax.random.split(key, 6)

    def uni(k, shape, fan_in):
        bound = 1.0 / jnp.sqrt(jnp.float32(fan_in))
        return jax.random.uniform(k, shape, jnp.float32, -bound, bound)

    return {
        "W1": uni(k1, (nS, nH), nS).astype(weight_dtype),
        "b1": uni(k2, (1, nH), nS),
        "W2": uni(k3, (nH, nH), nH).astype(weight_dtype),
        "b2": uni(k4, (1, nH), nH),
        "W3": uni(k5, (nH, nA), nH).astype(weight_dtype),
        "b3": uni(k6, (1, nA), nH),
    }


def _reference_forward(x, p):
    h = jax.nn.relu(x @ p["W1"].astype(jnp.float32) + p["b1"])
    h2 = jax.nn.relu(h @ p["W2"].astype(jnp.float32) + p["b2"])
    return jax.nn.softmax(h2 @ p["W3"].astype(jnp.float32) + p["b3"], axis=1)


if __name__ == "__main__":
    key = jax.random.PRNGKey(0)
    k_param, k_x = jax.random.split(key)

    # Small shapes consistent with policy_net(nS, nH, nA); B=50 deliberately
    # exercises the sublane-residual batch-padding path.
    B, nS, nH, nA = 50, 8, 32, 4
    params = init_policy_net_params(k_param, nS, nH, nA)  # f32 for a tight check
    prepared = prepare_policy_params(params)              # padded once, reused per call
    x = jax.random.normal(k_x, (B, nS), dtype=jnp.float32)

    out = jax.block_until_ready(policy_net_forward(x, prepared))
    ref = _reference_forward(x, params)

    assert out.shape == (B, nA)
    # Exact softmax normalization -> rows sum to 1 within f32 rounding.
    assert bool(jnp.allclose(jnp.sum(out, axis=1), 1.0, atol=1e-3))
    assert bool(jnp.allclose(out, ref, atol=2e-3, rtol=2e-3))

    print("KERNEL_OK")
</pallas_src>

<mosaic_0001>
module attributes {stable_mosaic.version = 11 : i64} {
  func.func @_policy_net_kernel(%arg0: i32, %arg1: memref<56x8xf32, #tpu.memory_space<vmem>>, %arg2: memref<8x128xf32, #tpu.memory_space<vmem>>, %arg3: memref<1x128xf32, #tpu.memory_space<vmem>>, %arg4: memref<128x128xf32, #tpu.memory_space<vmem>>, %arg5: memref<1x128xf32, #tpu.memory_space<vmem>>, %arg6: memref<128x128xf32, #tpu.memory_space<vmem>>, %arg7: memref<1x128xf32, #tpu.memory_space<vmem>>, %arg8: memref<56x128xf32, #tpu.memory_space<vmem>>) attributes {dimension_semantics = [#tpu.dimension_semantics<parallel>], iteration_bounds = array<i64: 1>, scalar_prefetch = 0 : i64, scratch_operands = 0 : i64, tpu.core_type = #tpu.core_type<tc>, window_params = [{transform_indices = @transform_0, window_bounds = array<i64: 56, 8>}, {pipeline_mode = #tpu.pipeline_mode<synchronous>, transform_indices = @transform_1, window_bounds = array<i64: 8, 128>}, {pipeline_mode = #tpu.pipeline_mode<synchronous>, transform_indices = @transform_2, window_bounds = array<i64: 1, 128>}, {pipeline_mode = #tpu.pipeline_mode<synchronous>, transform_indices = @transform_3, window_bounds = array<i64: 128, 128>}, {pipeline_mode = #tpu.pipeline_mode<synchronous>, transform_indices = @transform_4, window_bounds = array<i64: 1, 128>}, {pipeline_mode = #tpu.pipeline_mode<synchronous>, transform_indices = @transform_5, window_bounds = array<i64: 128, 128>}, {pipeline_mode = #tpu.pipeline_mode<synchronous>, transform_indices = @transform_6, window_bounds = array<i64: 1, 128>}, {transform_indices = @transform_7, window_bounds = array<i64: 56, 128>}]} {
    %c0 = arith.constant 0 : index
    %c0_0 = arith.constant 0 : index
    %0 = vector.load %arg1[%c0, %c0_0] : memref<56x8xf32, #tpu.memory_space<vmem>>, vector<56x8xf32>
    %c0_1 = arith.constant 0 : index
    %c0_2 = arith.constant 0 : index
    %1 = vector.load %arg2[%c0_1, %c0_2] : memref<8x128xf32, #tpu.memory_space<vmem>>, vector<8x128xf32>
    %cst = arith.constant dense<0.000000e+00> : vector<56x128xf32>
    %2 = tpu.matmul %0, %1, %cst {dimension_numbers = #tpu.dot_dimension_numbers<[1], [0], [0], [1], [0, 0, 1, 1], [], []>} : vector<56x8xf32>, vector<8x128xf32>, vector<56x128xf32> -> vector<56x128xf32>
    %c0_3 = arith.constant 0 : index
    %c0_4 = arith.constant 0 : index
    %3 = vector.load %arg3[%c0_3, %c0_4] : memref<1x128xf32, #tpu.memory_space<vmem>>, vector<1x128xf32>
    %4 = vector.broadcast %3 : vector<1x128xf32> to vector<56x128xf32>
    %5 = arith.addf %2, %4 : vector<56x128xf32>
    %cst_5 = arith.constant 0.000000e+00 : f32
    %6 = vector.broadcast %cst_5 : f32 to vector<56x128xf32>
    %7 = arith.maximumf %5, %6 : vector<56x128xf32>
    %c0_6 = arith.constant 0 : index
    %c0_7 = arith.constant 0 : index
    %8 = vector.load %arg4[%c0_6, %c0_7] : memref<128x128xf32, #tpu.memory_space<vmem>>, vector<128x128xf32>
    %cst_8 = arith.constant dense<0.000000e+00> : vector<56x128xf32>
    %9 = tpu.matmul %7, %8, %cst_8 {dimension_numbers = #tpu.dot_dimension_numbers<[1], [0], [0], [1], [0, 0, 1, 1], [], []>} : vector<56x128xf32>, vector<128x128xf32>, vector<56x128xf32> -> vector<56x128xf32>
    %c0_9 = arith.constant 0 : index
    %c0_10 = arith.constant 0 : index
    %10 = vector.load %arg5[%c0_9, %c0_10] : memref<1x128xf32, #tpu.memory_space<vmem>>, vector<1x128xf32>
    %11 = vector.broadcast %10 : vector<1x128xf32> to vector<56x128xf32>
    %12 = arith.addf %9, %11 : vector<56x128xf32>
    %cst_11 = arith.constant 0.000000e+00 : f32
    %13 = vector.broadcast %cst_11 : f32 to vector<56x128xf32>
    %14 = arith.maximumf %12, %13 : vector<56x128xf32>
    %c0_12 = arith.constant 0 : index
    %c0_13 = arith.constant 0 : index
    %15 = vector.load %arg6[%c0_12, %c0_13] : memref<128x128xf32, #tpu.memory_space<vmem>>, vector<128x128xf32>
    %cst_14 = arith.constant dense<0.000000e+00> : vector<56x128xf32>
    %16 = tpu.matmul %14, %15, %cst_14 {dimension_numbers = #tpu.dot_dimension_numbers<[1], [0], [0], [1], [0, 0, 1, 1], [], []>} : vector<56x128xf32>, vector<128x128xf32>, vector<56x128xf32> -> vector<56x128xf32>
    %c0_15 = arith.constant 0 : index
    %c0_16 = arith.constant 0 : index
    %17 = vector.load %arg7[%c0_15, %c0_16] : memref<1x128xf32, #tpu.memory_space<vmem>>, vector<1x128xf32>
    %18 = vector.broadcast %17 : vector<1x128xf32> to vector<56x128xf32>
    %19 = arith.addf %16, %18 : vector<56x128xf32>
    %cst_17 = arith.constant dense<0xFF800000> : vector<56xf32>
    %20 = vector.multi_reduction <maximumf>, %19, %cst_17 [1] : vector<56x128xf32> to vector<56xf32>
    %21 = vector.shape_cast %20 : vector<56xf32> to vector<56x1xf32>
    %22 = vector.broadcast %21 : vector<56x1xf32> to vector<56x128xf32>
    %23 = arith.subf %19, %22 : vector<56x128xf32>
    %24 = math.exp %23 : vector<56x128xf32>
    %cst_18 = arith.constant dense<0.000000e+00> : vector<56xf32>
    %25 = vector.multi_reduction <add>, %24, %cst_18 [1] : vector<56x128xf32> to vector<56xf32>
    %26 = vector.shape_cast %25 : vector<56xf32> to vector<56x1xf32>
    %27 = vector.broadcast %26 : vector<56x1xf32> to vector<56x128xf32>
    %28 = arith.divf %24, %27 : vector<56x128xf32>
    %c0_19 = arith.constant 0 : index
    %c0_20 = arith.constant 0 : index
    %29 = vector.load %arg8[%c0_19, %c0_20] : memref<56x128xf32, #tpu.memory_space<vmem>>, vector<56x128xf32>
    tpu.vector_store %arg8[%c0_19, %c0_20], %28 {strides = array<i32>} : memref<56x128xf32, #tpu.memory_space<vmem>>, vector<56x128xf32>,
    return
  }
  func.func @transform_0(%arg0: i32) -> (i32, i32) {
    %c0_i32 = arith.constant 0 : i32
    %c0_i32_0 = arith.constant 0 : i32
    return %arg0, %c0_i32 : i32, i32
  }
  func.func @transform_1(%arg0: i32) -> (i32, i32) {
    %c0_i32 = arith.constant 0 : i32
    %c0_i32_0 = arith.constant 0 : i32
    %c0_i32_1 = arith.constant 0 : i32
    return %c0_i32, %c0_i32_0 : i32, i32
  }
  func.func @transform_2(%arg0: i32) -> (i32, i32) {
    %c0_i32 = arith.constant 0 : i32
    %c0_i32_0 = arith.constant 0 : i32
    %c0_i32_1 = arith.constant 0 : i32
    return %c0_i32, %c0_i32_0 : i32, i32
  }
  func.func @transform_3(%arg0: i32) -> (i32, i32) {
    %c0_i32 = arith.constant 0 : i32
    %c0_i32_0 = arith.constant 0 : i32
    %c0_i32_1 = arith.constant 0 : i32
    return %c0_i32, %c0_i32_0 : i32, i32
  }
  func.func @transform_4(%arg0: i32) -> (i32, i32) {
    %c0_i32 = arith.constant 0 : i32
    %c0_i32_0 = arith.constant 0 : i32
    %c0_i32_1 = arith.constant 0 : i32
    return %c0_i32, %c0_i32_0 : i32, i32
  }
  func.func @transform_5(%arg0: i32) -> (i32, i32) {
    %c0_i32 = arith.constant 0 : i32
    %c0_i32_0 = arith.constant 0 : i32
    %c0_i32_1 = arith.constant 0 : i32
    return %c0_i32, %c0_i32_0 : i32, i32
  }
  func.func @transform_6(%arg0: i32) -> (i32, i32) {
    %c0_i32 = arith.constant 0 : i32
    %c0_i32_0 = arith.constant 0 : i32
    %c0_i32_1 = arith.constant 0 : i32
    return %c0_i32, %c0_i32_0 : i32, i32
  }
  func.func @transform_7(%arg0: i32) -> (i32, i32) {
    %c0_i32 = arith.constant 0 : i32
    %c0_i32_0 = arith.constant 0 : i32
    return %arg0, %c0_i32 : i32, i32
  }
}

</mosaic_0001>

<llo_original>
// kernel: _policy_forward_padded.1
$region0: #{_policy_forward_padded.1}
  #allocation0 [shape = 'u32[]', space=smem, size = 0x4, offset = 0x4, fixed_abs, tag = 'smem constant byte address 0x4 - core index']
  #allocation1 [shape = 'u32[144,128]{1,0:T(1,128)}', space=vmem, size = 0x12000, scoped, tag = 'internal scratch']
  %s0 = inlined_call_operand.vmem [shape: f32[56,8], index: 0, kind: input, shape index: {}]
  %s1 = inlined_call_operand.vmem [shape: f32[8,128], index: 1, kind: input, shape index: {}]
  %s2 = inlined_call_operand.vmem [shape: f32[1,128], index: 2, kind: input, shape index: {}]
  %s3 = inlined_call_operand.vmem [shape: f32[128,128], index: 3, kind: input, shape index: {}]
  %s4 = inlined_call_operand.vmem [shape: f32[1,128], index: 4, kind: input, shape index: {}]
  %s5 = inlined_call_operand.hbm [shape: f32[128,128], index: 5, kind: input, shape index: {}]
  %s6 = inlined_call_operand.vmem [shape: f32[1,128], index: 6, kind: input, shape index: {}]
  %s7 = inlined_call_operand.vmem [shape: f32[56,128], index: 7, kind: output, shape index: {}]
  %s8 = sld [smem:[#allocation0]]
  $region42: #{_policy_forward_padded.1} parent=0
    _
  %s10 = ssub.s32 1, %s8
  %s11 = scalar_select 0, %s10, %s8
  $region1: #{_policy_forward_padded.1} parent=0
    #allocation2 [shape = 'u8[65536]{0}', space=vmem, size = 0x10000, scoped, tag = 'input window, operand 5, single buffered']
    #allocation3 [shape = 's32[1]{0}', space=sflag, size = 0x4, scoped, tag = 'scoped memory for _policy_forward_padded.1']
    %12 = vsyncpa [#allocation3], 0
    // Predicated region
    $region2: #{_policy_forward_padded.1} parent=1 // pred_check
      _
    $region3: #{_policy_forward_padded.1} parent=1 // pred_check_branch
      %14 = sbr.rel (0) target = $region5
    $region4: #{_policy_forward_padded.1} parent=1 // pred_region
      _
    $region5: #{_policy_forward_padded.1} parent=1 // pred_fallthru
      _
    // Predicated region
    $region6: #{_policy_forward_padded.1} parent=1 // pred_check
      _
    $region7: #{_policy_forward_padded.1} parent=1 // pred_check_branch
      %16 = sbr.rel (0) target = $region9
    $region8: #{_policy_forward_padded.1} parent=1 // pred_region
      _
    $region9: #{_policy_forward_padded.1} parent=1 // pred_fallthru
      _
    // Predicated region
    $region10: #{_policy_forward_padded.1} parent=1 // pred_check
      _
    $region11: #{_policy_forward_padded.1} parent=1 // pred_check_branch
      %18 = sbr.rel (0) target = $region13
    $region12: #{_policy_forward_padded.1} parent=1 // pred_region
      _
    $region13: #{_policy_forward_padded.1} parent=1 // pred_fallthru
      _
    // Predicated region
    $region14: #{_policy_forward_padded.1} parent=1 // pred_check
      _
    $region15: #{_policy_forward_padded.1} parent=1 // pred_check_branch
      %20 = sbr.rel (0) target = $region17
    $region16: #{_policy_forward_padded.1} parent=1 // pred_region
      _
    $region17: #{_policy_forward_padded.1} parent=1 // pred_fallthru
      _
    // Predicated region
    $region18: #{_policy_forward_padded.1} parent=1 // pred_check
      _
    $region19: #{_policy_forward_padded.1} parent=1 // pred_check_branch
      %22 = sbr.rel (0) target = $region21
    $region20: #{_policy_forward_padded.1} parent=1 // pred_region
      _
    $region21: #{_policy_forward_padded.1} parent=1 // pred_fallthru
      _
    // Predicated region
    $region22: #{_policy_forward_padded.1} parent=1 // pred_check
      _
    $region23: #{_policy_forward_padded.1} parent=1 // pred_check_branch
      %24 = sbr.rel (0) target = $region25
    $region24: #{_policy_forward_padded.1} parent=1 // pred_region
      %s26 = ssub.s32 2048, 2048
      %27 = vsyncadd [#allocation3], %s26
      %s28 = sshll.u32 [#allocation2], 4
      %s29 = int_to_ptr.vmem [resolvable:$true] %s28
      %34 = dma.hbm_to_vmem [thread:$0]  %s5, 2048, %s29, [#allocation3], 128, 128, 8
    $region25: #{_policy_forward_padded.1} parent=1 // pred_fallthru
      _
    // Predicated region
    $region26: #{_policy_forward_padded.1} parent=1 // pred_check
      _
    $region27: #{_policy_forward_padded.1} parent=1 // pred_check_branch
      %36 = sbr.rel (0) target = $region29
    $region28: #{_policy_forward_padded.1} parent=1 // pred_region
      _
    $region29: #{_policy_forward_padded.1} parent=1 // pred_fallthru
      _
    // Predicated region
    $region30: #{_policy_forward_padded.1} parent=1 // pred_check
      _
    $region31: #{_policy_forward_padded.1} parent=1 // pred_check_branch
      %38 = sbr.rel (0) target = $region33
    $region32: #{_policy_forward_padded.1} parent=1 // pred_region
      %39 = dma.done [#allocation3], 2048
    $region33: #{_policy_forward_padded.1} parent=1 // pred_fallthru
      _
    %v40 = vld [vmem:[%s0] sm:$0xff]
    %v41 = vld [vmem:[%s0 + $0x8] sm:$0xff]
    %v42 = vld [vmem:[%s0 + $0x10] sm:$0xff]
    %v43 = vld [vmem:[%s0 + $0x18] sm:$0xff]
    %v44 = vld [vmem:[%s0 + $0x20] sm:$0xff]
    %v45 = vld [vmem:[%s0 + $0x28] sm:$0xff]
    %v46 = vld [vmem:[%s0 + $0x30] sm:$0xff]
    %v47 = vld [vmem:[%s1] sm:$0xff]
    %v48 = vld [vmem:[%s2] sm:$0x1]
    %v50 = vlaneseq
    %v51 = vshrl.u32 %v50, 7
    %v52 = vsub.s32 0, %v51
    %v53 = vrot.slane %v48, %v52
    %vm55 = vcmask 64512
    %v57 = vsel %vm55, %v40, 0
    %v60 = vsel %vm55, %v41, 0
    %v63 = vsel %vm55, %v42, 0
    %v66 = vsel %vm55, %v43, 0
    %v69 = vsel %vm55, %v44, 0
    %v72 = vsel %vm55, %v45, 0
    %v75 = vsel %vm55, %v46, 0
    %77 = vmatprep.subr.mxu0 0.0
    %78 = vmatpush1.msra.mxu0 %v47
    %79 = vmatprep.subr.mxu0 0.0
    %80 = vmatpush1.msra.mxu0 0.0
    %81 = vmatprep.subr.mxu0 0.0
    %82 = vmatpush1.msra.mxu0 0.0
    %83 = vmatprep.subr.mxu0 0.0
    %84 = vmatpush1.msra.mxu0 0.0
    %85 = vmatprep.subr.mxu0 0.0
    %86 = vmatpush1.msra.mxu0 0.0
    %87 = vmatprep.subr.mxu0 0.0
    %88 = vmatpush1.msra.mxu0 0.0
    %89 = vmatprep.subr.mxu0 0.0
    %90 = vmatpush1.msra.mxu0 0.0
    %91 = vmatprep.subr.mxu0 0.0
    %92 = vmatpush1.msra.mxu0 0.0
    %93 = vmatprep.subr.mxu0 0.0
    %94 = vmatpush1.msra.mxu0 0.0
    %95 = vmatprep.subr.mxu0 0.0
    %96 = vmatpush1.msra.mxu0 0.0
    %97 = vmatprep.subr.mxu0 0.0
    %98 = vmatpush1.msra.mxu0 0.0
    %99 = vmatprep.subr.mxu0 0.0
    %100 = vmatpush1.msra.mxu0 0.0
    %101 = vmatprep.subr.mxu0 0.0
    %102 = vmatpush1.msra.mxu0 0.0
    %103 = vmatprep.subr.mxu0 0.0
    %104 = vmatpush1.msra.mxu0 0.0
    %105 = vmatprep.subr.mxu0 0.0
    %106 = vmatpush1.msra.mxu0 0.0
    %107 = vmatprep.subr.mxu0 0.0
    %108 = vmatpush1.msra.mxu0 0.0
    %109 = vmatprep.subr.mxu0 0.0
    %110 = vmatpush1.msra.mxu0 0.0
    %111 = vmatprep.subr.mxu0 0.0
    %112 = vmatpush1.msra.mxu0 0.0
    %113 = vmatprep.subr.mxu0 0.0
    %114 = vmatpush1.msra.mxu0 0.0
    %115 = vmatprep.subr.mxu0 0.0
    %116 = vmatpush1.msra.mxu0 0.0
    %117 = vmatprep.subr.mxu0 0.0
    %118 = vmatpush1.msra.mxu0 0.0
    %119 = vmatprep.subr.mxu0 0.0
    %120 = vmatpush1.msra.mxu0 0.0
    %121 = vmatprep.subr.mxu0 0.0
    %122 = vmatpush1.msra.mxu0 0.0
    %123 = vmatprep.subr.mxu0 0.0
    %124 = vmatpush1.msra.mxu0 0.0
    %125 = vmatprep.subr.mxu0 0.0
    %126 = vmatpush1.msra.mxu0 0.0
    %127 = vmatprep.subr.mxu0 0.0
    %128 = vmatpush1.msra.mxu0 0.0
    %129 = vmatprep.subr.mxu0 0.0
    %130 = vmatpush1.msra.mxu0 0.0
    %131 = vmatprep.subr.mxu0 0.0
    %132 = vmatpush1.msra.mxu0 0.0
    %133 = vmatprep.subr.mxu0 0.0
    %134 = vmatpush1.msra.mxu0 0.0
    %135 = vmatprep.subr.mxu0 0.0
    %136 = vmatpush1.msra.mxu0 0.0
    %137 = vmatprep.subr.mxu0 0.0
    %138 = vmatpush1.msra.mxu0 0.0
    %139 = vmatprep.subr.mxu0 0.0
    %140 = vmatpush1.msra.mxu0 0.0
    %141 = vmatprep.mubr.f32.mxu0 0.0
    %142 = vmatmul.mubr.f32.gmra.mrb[0].mxu0 %v57
    %v143 = vpop.f32.mrb[0].mxu0
    %v144 = vadd.f32 %v53, %v143
    %v145 = vpop.f32.mrb[0].mxu0
    %146 = vmatprep.mubr.f32.mxu0 0.0
    %147 = vmatmul.mubr.f32.gmra.mrb[0].mxu0 %v60
    %v148 = vpop.f32.mrb[0].mxu0
    %v149 = vadd.f32 %v53, %v148
    %v150 = vpop.f32.mrb[0].mxu0
    %151 = vmatprep.mubr.f32.mxu0 0.0
    %152 = vmatmul.mubr.f32.gmra.mrb[0].mxu0 %v63
    %v153 = vpop.f32.mrb[0].mxu0
    %v154 = vadd.f32 %v53, %v153
    %v155 = vpop.f32.mrb[0].mxu0
    %156 = vmatprep.mubr.f32.mxu0 0.0
    %157 = vmatmul.mubr.f32.gmra.mrb[0].mxu0 %v66
    %v158 = vpop.f32.mrb[0].mxu0
    %v159 = vadd.f32 %v53, %v158
    %v160 = vpop.f32.mrb[0].mxu0
    %161 = vmatprep.mubr.f32.mxu0 0.0
    %162 = vmatmul.mubr.f32.gmra.mrb[0].mxu0 %v69
    %v163 = vpop.f32.mrb[0].mxu0
    %v164 = vadd.f32 %v53, %v163
    %v165 = vpop.f32.mrb[0].mxu0
    %166 = vmatprep.mubr.f32.mxu0 0.0
    %167 = vmatmul.mubr.f32.gmra.mrb[0].mxu0 %v72
    %v168 = vpop.f32.mrb[0].mxu0
    %v169 = vadd.f32 %v53, %v168
    %v170 = vpop.f32.mrb[0].mxu0
    %171 = vmatprep.mubr.f32.mxu0 0.0
    %172 = vmatmul.mubr.f32.gmra.mrb[0].mxu0 %v75
    %v173 = vpop.f32.mrb[0].mxu0
    %v174 = vadd.f32 %v53, %v173
    %v175 = vpop.f32.mrb[0].mxu0
    %176 = vdwg.mxu0
    %v177 = vmax.f32 %v144, 0.0
    %v178 = vmax.f32 %v149, 0.0
    %v179 = vmax.f32 %v154, 0.0
    %v180 = vmax.f32 %v159, 0.0
    %v181 = vmax.f32 %v164, 0.0
    %v182 = vmax.f32 %v169, 0.0
    %v183 = vmax.f32 %v174, 0.0
    %v184 = vld [vmem:[%s3] sm:$0xff]
    %v185 = vld [vmem:[%s3 + $0x8] sm:$0xff]
    %v186 = vld [vmem:[%s3 + $0x10] sm:$0xff]
    %v187 = vld [vmem:[%s3 + $0x18] sm:$0xff]
    %v188 = vld [vmem:[%s3 + $0x20] sm:$0xff]
    %v189 = vld [vmem:[%s3 + $0x28] sm:$0xff]
    %v190 = vld [vmem:[%s3 + $0x30] sm:$0xff]
    %v191 = vld [vmem:[%s3 + $0x38] sm:$0xff]
    %v192 = vld [vmem:[%s3 + $0x40] sm:$0xff]
    %v193 = vld [vmem:[%s3 + $0x48] sm:$0xff]
    %v194 = vld [vmem:[%s3 + $0x50] sm:$0xff]
    %v195 = vld [vmem:[%s3 + $0x58] sm:$0xff]
    %v196 = vld [vmem:[%s3 + $0x60] sm:$0xff]
    %v197 = vld [vmem:[%s3 + $0x68] sm:$0xff]
    %v198 = vld [vmem:[%s3 + $0x70] sm:$0xff]
    %v199 = vld [vmem:[%s3 + $0x78] sm:$0xff]
    %v200 = vld [vmem:[%s4] sm:$0x1]
    %v202 = vlaneseq
    %v203 = vshrl.u32 %v202, 7
    %v204 = vsub.s32 0, %v203
    %v205 = vrot.slane %v200, %v204
    %207 = vmatprep.subr.mxu0 0.0
    %208 = vmatpush1.msra.mxu0 %v184
    %209 = vmatprep.subr.mxu0 0.0
    %210 = vmatpush1.msra.mxu0 %v185
    %211 = vmatprep.subr.mxu0 0.0
    %212 = vmatpush1.msra.mxu0 %v186
    %213 = vmatprep.subr.mxu0 0.0
    %214 = vmatpush1.msra.mxu0 %v187
    %215 = vmatprep.subr.mxu0 0.0
    %216 = vmatpush1.msra.mxu0 %v188
    %217 = vmatprep.subr.mxu0 0.0
    %218 = vmatpush1.msra.mxu0 %v189
    %219 = vmatprep.subr.mxu0 0.0
    %220 = vmatpush1.msra.mxu0 %v190
    %221 = vmatprep.subr.mxu0 0.0
    %222 = vmatpush1.msra.mxu0 %v191
    %223 = vmatprep.subr.mxu0 0.0
    %224 = vmatpush1.msra.mxu0 %v192
    %225 = vmatprep.subr.mxu0 0.0
    %226 = vmatpush1.msra.mxu0 %v193
    %227 = vmatprep.subr.mxu0 0.0
    %228 = vmatpush1.msra.mxu0 %v194
    %229 = vmatprep.subr.mxu0 0.0
    %230 = vmatpush1.msra.mxu0 %v195
    %231 = vmatprep.subr.mxu0 0.0
    %232 = vmatpush1.msra.mxu0 %v196
    %233 = vmatprep.subr.mxu0 0.0
    %234 = vmatpush1.msra.mxu0 %v197
    %235 = vmatprep.subr.mxu0 0.0
    %236 = vmatpush1.msra.mxu0 %v198
    %237 = vmatprep.subr.mxu0 0.0
    %238 = vmatpush1.msra.mxu0 %v199
    %239 = vmatprep.subr.mxu0 0.0
    %240 = vmatpush1.msra.mxu0 0.0
    %241 = vmatprep.subr.mxu0 0.0
    %242 = vmatpush1.msra.mxu0 0.0
    %243 = vmatprep.subr.mxu0 0.0
    %244 = vmatpush1.msra.mxu0 0.0
    %245 = vmatprep.subr.mxu0 0.0
    %246 = vmatpush1.msra.mxu0 0.0
    %247 = vmatprep.subr.mxu0 0.0
    %248 = vmatpush1.msra.mxu0 0.0
    %249 = vmatprep.subr.mxu0 0.0
    %250 = vmatpush1.msra.mxu0 0.0
    %251 = vmatprep.subr.mxu0 0.0
    %252 = vmatpush1.msra.mxu0 0.0
    %253 = vmatprep.subr.mxu0 0.0
    %254 = vmatpush1.msra.mxu0 0.0
    %255 = vmatprep.subr.mxu0 0.0
    %256 = vmatpush1.msra.mxu0 0.0
    %257 = vmatprep.subr.mxu0 0.0
    %258 = vmatpush1.msra.mxu0 0.0
    %259 = vmatprep.subr.mxu0 0.0
    %260 = vmatpush1.msra.mxu0 0.0
    %261 = vmatprep.subr.mxu0 0.0
    %262 = vmatpush1.msra.mxu0 0.0
    %263 = vmatprep.subr.mxu0 0.0
    %264 = vmatpush1.msra.mxu0 0.0
    %265 = vmatprep.subr.mxu0 0.0
    %266 = vmatpush1.msra.mxu0 0.0
    %267 = vmatprep.subr.mxu0 0.0
    %268 = vmatpush1.msra.mxu0 0.0
    %269 = vmatprep.subr.mxu0 0.0
    %270 = vmatpush1.msra.mxu0 0.0
    %271 = vmatprep.mubr.f32.mxu0 0.0
    %272 = vmatmul.mubr.f32.gmra.mrb[0].mxu0 %v177
    %v273 = vpop.f32.mrb[0].mxu0
    %v274 = vadd.f32 %v205, %v273
    %v275 = vpop.f32.mrb[0].mxu0
    %276 = vmatprep.mubr.f32.mxu0 0.0
    %277 = vmatmul.mubr.f32.gmra.mrb[0].mxu0 %v178
    %v278 = vpop.f32.mrb[0].mxu0
    %v279 = vadd.f32 %v205, %v278
    %v280 = vpop.f32.mrb[0].mxu0
    %281 = vmatprep.mubr.f32.mxu0 0.0
    %282 = vmatmul.mubr.f32.gmra.mrb[0].mxu0 %v179
    %v283 = vpop.f32.mrb[0].mxu0
    %v284 = vadd.f32 %v205, %v283
    %v285 = vpop.f32.mrb[0].mxu0
    %286 = vmatprep.mubr.f32.mxu0 0.0
    %287 = vmatmul.mubr.f32.gmra.mrb[0].mxu0 %v180
    %v288 = vpop.f32.mrb[0].mxu0
    %v289 = vadd.f32 %v205, %v288
    %v290 = vpop.f32.mrb[0].mxu0
    %291 = vmatprep.mubr.f32.mxu0 0.0
    %292 = vmatmul.mubr.f32.gmra.mrb[0].mxu0 %v181
    %v293 = vpop.f32.mrb[0].mxu0
    %v294 = vadd.f32 %v205, %v293
    %v295 = vpop.f32.mrb[0].mxu0
    %296 = vmatprep.mubr.f32.mxu0 0.0
    %297 = vmatmul.mubr.f32.gmra.mrb[0].mxu0 %v182
    %v298 = vpop.f32.mrb[0].mxu0
    %v299 = vadd.f32 %v205, %v298
    %v300 = vpop.f32.mrb[0].mxu0
    %301 = vmatprep.mubr.f32.mxu0 0.0
    %302 = vmatmul.mubr.f32.gmra.mrb[0].mxu0 %v183
    %v303 = vpop.f32.mrb[0].mxu0
    %v304 = vadd.f32 %v205, %v303
    %v305 = vpop.f32.mrb[0].mxu0
    %306 = vdwg.mxu0
    %v307 = vmax.f32 %v274, 0.0
    %v308 = vmax.f32 %v279, 0.0
    %v309 = vmax.f32 %v284, 0.0
    %v310 = vmax.f32 %v289, 0.0
    %v311 = vmax.f32 %v294, 0.0
    %v312 = vmax.f32 %v299, 0.0
    %v313 = vmax.f32 %v304, 0.0
    %v314 = vld [vmem:[#allocation2] sm:$0xff]
    %v315 = vld [vmem:[#allocation2 + $0x8] sm:$0xff]
    %v316 = vld [vmem:[#allocation2 + $0x10] sm:$0xff]
    %v317 = vld [vmem:[#allocation2 + $0x18] sm:$0xff]
    %v318 = vld [vmem:[#allocation2 + $0x20] sm:$0xff]
    %v319 = vld [vmem:[#allocation2 + $0x28] sm:$0xff]
    %v320 = vld [vmem:[#allocation2 + $0x30] sm:$0xff]
    %v321 = vld [vmem:[#allocation2 + $0x38] sm:$0xff]
    %v322 = vld [vmem:[#allocation2 + $0x40] sm:$0xff]
    %v323 = vld [vmem:[#allocation2 + $0x48] sm:$0xff]
    %v324 = vld [vmem:[#allocation2 + $0x50] sm:$0xff]
    %v325 = vld [vmem:[#allocation2 + $0x58] sm:$0xff]
    %v326 = vld [vmem:[#allocation2 + $0x60] sm:$0xff]
    %v327 = vld [vmem:[#allocation2 + $0x68] sm:$0xff]
    %v328 = vld [vmem:[#allocation2 + $0x70] sm:$0xff]
    %v329 = vld [vmem:[#allocation2 + $0x78] sm:$0xff]
    %v330 = vld [vmem:[%s6] sm:$0x1]
    %v332 = vlaneseq
    %v333 = vshrl.u32 %v332, 7
    %v334 = vsub.s32 0, %v333
    %v335 = vrot.slane %v330, %v334
    %337 = vmatprep.subr.mxu0 0.0
    %338 = vmatpush1.msra.mxu0 %v314
    %339 = vmatprep.subr.mxu0 0.0
    %340 = vmatpush1.msra.mxu0 %v315
    %341 = vmatprep.subr.mxu0 0.0
    %342 = vmatpush1.msra.mxu0 %v316
    %343 = vmatprep.subr.mxu0 0.0
    %344 = vmatpush1.msra.mxu0 %v317
    %345 = vmatprep.subr.mxu0 0.0
    %346 = vmatpush1.msra.mxu0 %v318
    %347 = vmatprep.subr.mxu0 0.0
    %348 = vmatpush1.msra.mxu0 %v319
    %349 = vmatprep.subr.mxu0 0.0
    %350 = vmatpush1.msra.mxu0 %v320
    %351 = vmatprep.subr.mxu0 0.0
    %352 = vmatpush1.msra.mxu0 %v321
    %353 = vmatprep.subr.mxu0 0.0
    %354 = vmatpush1.msra.mxu0 %v322
    %355 = vmatprep.subr.mxu0 0.0
    %356 = vmatpush1.msra.mxu0 %v323
    %357 = vmatprep.subr.mxu0 0.0
    %358 = vmatpush1.msra.mxu0 %v324
    %359 = vmatprep.subr.mxu0 0.0
    %360 = vmatpush1.msra.mxu0 %v325
    %361 = vmatprep.subr.mxu0 0.0
    %362 = vmatpush1.msra.mxu0 %v326
    %363 = vmatprep.subr.mxu0 0.0
    %364 = vmatpush1.msra.mxu0 %v327
    %365 = vmatprep.subr.mxu0 0.0
    %366 = vmatpush1.msra.mxu0 %v328
    %367 = vmatprep.subr.mxu0 0.0
    %368 = vmatpush1.msra.mxu0 %v329
    %369 = vmatprep.subr.mxu0 0.0
    %370 = vmatpush1.msra.mxu0 0.0
    %371 = vmatprep.subr.mxu0 0.0
    %372 = vmatpush1.msra.mxu0 0.0
    %373 = vmatprep.subr.mxu0 0.0
    %374 = vmatpush1.msra.mxu0 0.0
    %375 = vmatprep.subr.mxu0 0.0
    %376 = vmatpush1.msra.mxu0 0.0
    %377 = vmatprep.subr.mxu0 0.0
    %378 = vmatpush1.msra.mxu0 0.0
    %379 = vmatprep.subr.mxu0 0.0
    %380 = vmatpush1.msra.mxu0 0.0
    %381 = vmatprep.subr.mxu0 0.0
    %382 = vmatpush1.msra.mxu0 0.0
    %383 = vmatprep.subr.mxu0 0.0
    %384 = vmatpush1.msra.mxu0 0.0
    %385 = vmatprep.subr.mxu0 0.0
    %386 = vmatpush1.msra.mxu0 0.0
    %387 = vmatprep.subr.mxu0 0.0
    %388 = vmatpush1.msra.mxu0 0.0
    %389 = vmatprep.subr.mxu0 0.0
    %390 = vmatpush1.msra.mxu0 0.0
    %391 = vmatprep.subr.mxu0 0.0
    %392 = vmatpush1.msra.mxu0 0.0
    %393 = vmatprep.subr.mxu0 0.0
    %394 = vmatpush1.msra.mxu0 0.0
    %395 = vmatprep.subr.mxu0 0.0
    %396 = vmatpush1.msra.mxu0 0.0
    %397 = vmatprep.subr.mxu0 0.0
    %398 = vmatpush1.msra.mxu0 0.0
    %399 = vmatprep.subr.mxu0 0.0
    %400 = vmatpush1.msra.mxu0 0.0
    %401 = vmatprep.mubr.f32.mxu0 0.0
    %402 = vmatmul.mubr.f32.gmra.mrb[0].mxu0 %v307
    %v403 = vpop.f32.mrb[0].mxu0
    %v404 = vadd.f32 %v335, %v403
    %v405 = vpop.f32.mrb[0].mxu0
    %406 = vmatprep.mubr.f32.mxu0 0.0
    %407 = vmatmul.mubr.f32.gmra.mrb[0].mxu0 %v308
    %v408 = vpop.f32.mrb[0].mxu0
    %v409 = vadd.f32 %v335, %v408
    %v410 = vpop.f32.mrb[0].mxu0
    %411 = vmatprep.mubr.f32.mxu0 0.0
    %412 = vmatmul.mubr.f32.gmra.mrb[0].mxu0 %v309
    %v413 = vpop.f32.mrb[0].mxu0
    %v414 = vadd.f32 %v335, %v413
    %v415 = vpop.f32.mrb[0].mxu0
    %416 = vmatprep.mubr.f32.mxu0 0.0
    %417 = vmatmul.mubr.f32.gmra.mrb[0].mxu0 %v310
    %v418 = vpop.f32.mrb[0].mxu0
    %v419 = vadd.f32 %v335, %v418
    %v420 = vpop.f32.mrb[0].mxu0
    %421 = vmatprep.mubr.f32.mxu0 0.0
    %422 = vmatmul.mubr.f32.gmra.mrb[0].mxu0 %v311
    %v423 = vpop.f32.mrb[0].mxu0
    %v424 = vadd.f32 %v335, %v423
    %v425 = vpop.f32.mrb[0].mxu0
    %426 = vmatprep.mubr.f32.mxu0 0.0
    %427 = vmatmul.mubr.f32.gmra.mrb[0].mxu0 %v312
    %v428 = vpop.f32.mrb[0].mxu0
    %v429 = vadd.f32 %v335, %v428
    %v430 = vpop.f32.mrb[0].mxu0
    %431 = vmatprep.mubr.f32.mxu0 0.0
    %432 = vmatmul.mubr.f32.gmra.mrb[0].mxu0 %v313
    %v433 = vpop.f32.mrb[0].mxu0
    %v434 = vadd.f32 %v335, %v433
    %v435 = vpop.f32.mrb[0].mxu0
    %436 = vdwg.mxu0
    %437 = vmax.xlane.f32.xlu0 %v404
    %v438 = vpop.xlane.xlu0 %437
    %439 = vmax.xlane.f32.xlu0 %v409
    %v440 = vpop.xlane.xlu0 %439
    %441 = vmax.xlane.f32.xlu0 %v414
    %v442 = vpop.xlane.xlu0 %441
    %443 = vmax.xlane.f32.xlu0 %v419
    %v444 = vpop.xlane.xlu0 %443
    %445 = vmax.xlane.f32.xlu0 %v424
    %v446 = vpop.xlane.xlu0 %445
    %447 = vmax.xlane.f32.xlu0 %v429
    %v448 = vpop.xlane.xlu0 %447
    %449 = vmax.xlane.f32.xlu0 %v434
    %v450 = vpop.xlane.xlu0 %449
    %v451 = vsub.f32 %v404, %v438
    %v452 = vsub.f32 %v409, %v440
    %v453 = vsub.f32 %v414, %v442
    %v454 = vsub.f32 %v419, %v444
    %v455 = vsub.f32 %v424, %v446
    %v456 = vsub.f32 %v429, %v448
    %v457 = vsub.f32 %v434, %v450
    %v458 = vmul.f32 %v451, 1.442695
    %v459 = vpow.pop %v458
    %v460 = vmul.f32 %v452, 1.442695
    %v461 = vpow.pop %v460
    %v462 = vmul.f32 %v453, 1.442695
    %v463 = vpow.pop %v462
    %v464 = vmul.f32 %v454, 1.442695
    %v465 = vpow.pop %v464
    %v466 = vmul.f32 %v455, 1.442695
    %v467 = vpow.pop %v466
    %v468 = vmul.f32 %v456, 1.442695
    %v469 = vpow.pop %v468
    %v470 = vmul.f32 %v457, 1.442695
    %v471 = vpow.pop %v470
    %472 = vadd.xlane.f32.xlu0 %v459
    %v473 = vpop.xlane.xlu0 %472
    %474 = vadd.xlane.f32.xlu0 %v461
    %v475 = vpop.xlane.xlu0 %474
    %476 = vadd.xlane.f32.xlu0 %v463
    %v477 = vpop.xlane.xlu0 %476
    %478 = vadd.xlane.f32.xlu0 %v465
    %v479 = vpop.xlane.xlu0 %478
    %480 = vadd.xlane.f32.xlu0 %v467
    %v481 = vpop.xlane.xlu0 %480
    %482 = vadd.xlane.f32.xlu0 %v469
    %v483 = vpop.xlane.xlu0 %482
    %484 = vadd.xlane.f32.xlu0 %v471
    %v485 = vpop.xlane.xlu0 %484
    %v486 = vrcp.pop %v473
    %v487 = vmul.f32 %v459, %v486
    %v488 = vrcp.pop %v475
    %v489 = vmul.f32 %v461, %v488
    %v490 = vrcp.pop %v477
    %v491 = vmul.f32 %v463, %v490
    %v492 = vrcp.pop %v479
    %v493 = vmul.f32 %v465, %v492
    %v494 = vrcp.pop %v481
    %v495 = vmul.f32 %v467, %v494
    %v496 = vrcp.pop %v483
    %v497 = vmul.f32 %v469, %v496
    %v498 = vrcp.pop %v485
    %v499 = vmul.f32 %v471, %v498
    %500 = vst [vmem:[%s7] sm:$0xff] %v487
    %501 = vst [vmem:[%s7 + $0x8] sm:$0xff] %v489
    %502 = vst [vmem:[%s7 + $0x10] sm:$0xff] %v491
    %503 = vst [vmem:[%s7 + $0x18] sm:$0xff] %v493
    %504 = vst [vmem:[%s7 + $0x20] sm:$0xff] %v495
    %505 = vst [vmem:[%s7 + $0x28] sm:$0xff] %v497
    %506 = vst [vmem:[%s7 + $0x30] sm:$0xff] %v499
    // Predicated region
    $region34: #{_policy_forward_padded.1} parent=1 // pred_check
      _
    $region35: #{_policy_forward_padded.1} parent=1 // pred_check_branch
      %508 = sbr.rel (0) target = $region37
    $region36: #{_policy_forward_padded.1} parent=1 // pred_region
      _
    $region37: #{_policy_forward_padded.1} parent=1 // pred_fallthru
      _
    // Predicated region
    $region38: #{_policy_forward_padded.1} parent=1 // pred_check
      _
    $region39: #{_policy_forward_padded.1} parent=1 // pred_check_branch
      %510 = sbr.rel (0) target = $region41
    $region40: #{_policy_forward_padded.1} parent=1 // pred_region
      _
    $region41: #{_policy_forward_padded.1} parent=1 // pred_fallthru
      _
    %511 = vsyncpa [#allocation3], 1

</llo_original>
